<compile_context>
chip_gen: v6e
topology: v6e:2x2x1
jax: 0.10.0
libtpu: 0.0.40
codegen_flags: <defaults>
</compile_context>

<pallas_src>
import math
from typing import NamedTuple

import jax
import jax.numpy as jnp
from jax.experimental import pallas as pl
from jax.experimental.pallas import tpu as pltpu


def _round_up(n: int, m: int) -> int:
    return ((n + m - 1) // m) * m


class DQNParams(NamedTuple):
    w1: jax.Array  # (in_pad, hid_pad)   zero rows beyond input_dim
    b1: jax.Array  # (1, hid_pad)
    w2: jax.Array  # (hid_pad, hid_pad)
    b2: jax.Array  # (1, hid_pad)
    w3: jax.Array  # (hid_pad, out_pad)  zero lanes beyond out_dim
    b3: jax.Array  # (1, out_pad)
    input_dim: int
    hidden: int
    out_dim: int


def dqn_kernel(x_ref, w1_ref, b1_ref, w2_ref, b2_ref, w3_ref, b3_ref, o_ref, xpad_ref):
    d_in = x_ref.shape[-1]
    out_dim = o_ref.shape[-1]

    # Lane-pad x (d_in -> in_pad) inside VMEM: zero the scratch, masked-store the real
    # features into lanes [0, d_in).  Padded w1 rows are zero, so padded lanes are inert.
    xpad_ref[...] = jnp.zeros_like(xpad_ref)
    xpad_ref[:, :d_in] = x_ref[...]

    # fc1 + ReLU
    h1 = jnp.dot(xpad_ref[...], w1_ref[...], preferred_element_type=jnp.float32) + b1_ref[...]
    h1 = jnp.maximum(h1, 0.0)
    # fc2 + ReLU
    h2 = jnp.dot(h1, w2_ref[...], preferred_element_type=jnp.float32) + b2_ref[...]
    h2 = jnp.maximum(h2, 0.0)
    # fc3 (no activation): aligned matmul on padded w3, then store only the real lanes.
    out_full = jnp.dot(h2, w3_ref[...], preferred_element_type=jnp.float32) + b3_ref[...]
    o_ref[...] = out_full[:, :out_dim].astype(o_ref.dtype)


def _pick_batch_tile(B: int) -> int:
    if B <= 128:
        # Single grid step; round up to the f32 sublane quantum.
        return _round_up(max(B, 1), 8)
    # Multiple of 128, up to 512, but capped so there are always >= 2 tiles
    # (the batch axis is the only "parallel" axis -> keeps both v7x TCs busy).
    return min(512, max(128, ((B // 2) // 128) * 128))


def _vmem_limit_bytes(TB, in_pad, hid_pad, out_pad) -> int:
    f32 = 4
    x_blk = TB * in_pad * f32
    o_blk = TB * out_pad * f32          # lane-padded output buffer, conservative
    weights = (in_pad * hid_pad + hid_pad * hid_pad + hid_pad * out_pad
               + 2 * hid_pad + out_pad) * f32
    scratch = TB * in_pad * f32
    need = 2 * (x_blk + o_blk + weights) + scratch   # double-buffered pipeline
    return int(min(32 << 20, max(16 << 20, 2 * need)))


def dqn_forward(x, params: DQNParams):
    """Fused 3-layer MLP. Batch tiled over a parallel grid axis; weights stay
    VMEM-resident (constant index_map -> fetched once). Returns (B, out_dim) f32."""
    w1, b1, w2, b2, w3, b3 = params[:6]
    B, d_in = x.shape
    in_pad, hid_pad = w1.shape
    out_pad = w3.shape[1]
    out_dim = params.out_dim

    x = x.astype(jnp.float32)
    TB = _pick_batch_tile(B)
    grid = (pl.cdiv(B, TB),)             # partial last tile is masked by Pallas

    def wspec(a):
        # Full array as one block, same block every batch tile -> stays VMEM resident.
        return pl.BlockSpec(a.shape, lambda i: (0, 0))

    out = pl.pallas_call(
        dqn_kernel,
        out_shape=jax.ShapeDtypeStruct((B, out_dim), jnp.float32),
        grid=grid,
        in_specs=[
            pl.BlockSpec((TB, d_in), lambda i: (i, 0)),   # last dim == full array dim
            wspec(w1), wspec(b1), wspec(w2), wspec(b2), wspec(w3), wspec(b3),
        ],
        out_specs=pl.BlockSpec((TB, out_dim), lambda i: (i, 0)),
        scratch_shapes=[pltpu.VMEM((TB, in_pad), jnp.float32)],
        compiler_params=pltpu.CompilerParams(
            dimension_semantics=("parallel",),   # shard batch tiles across v7x's 2 TCs
            vmem_limit_bytes=_vmem_limit_bytes(TB, in_pad, hid_pad, out_pad),
        ),
    )(x, w1, b1, w2, b2, w3, b3)
    return out


def init_dqn_params(key, input_dim, output_dim, hidden=64) -> DQNParams:
    """nn.Linear default init (U(-1/sqrt(fan_in), 1/sqrt(fan_in))) on the true shapes,
    zero-padded to lane-/MXU-friendly sizes (multiples of 128)."""
    in_pad = _round_up(input_dim, 128)
    hid_pad = _round_up(hidden, 128)
    out_pad = _round_up(output_dim, 128)

    def linear(k, fan_in, fan_out, fan_in_pad, fan_out_pad):
        kw, kb = jax.random.split(k)
        bound = 1.0 / math.sqrt(fan_in)
        w = jax.random.uniform(kw, (fan_in, fan_out), jnp.float32, -bound, bound)
        b = jax.random.uniform(kb, (1, fan_out), jnp.float32, -bound, bound)
        w_p = jnp.zeros((fan_in_pad, fan_out_pad), jnp.float32).at[:fan_in, :fan_out].set(w)
        b_p = jnp.zeros((1, fan_out_pad), jnp.float32).at[:, :fan_out].set(b)
        return w_p, b_p

    k1, k2, k3 = jax.random.split(key, 3)
    w1, b1 = linear(k1, input_dim, hidden, in_pad, hid_pad)
    w2, b2 = linear(k2, hidden, hidden, hid_pad, hid_pad)
    w3, b3 = linear(k3, hidden, output_dim, hid_pad, out_pad)
    return DQNParams(w1, b1, w2, b2, w3, b3, input_dim, hidden, output_dim)


def dqn_reference(x, params: DQNParams):
    """Pure-JAX reference on the true (unpadded) weight sub-blocks."""
    d_in, hid, out = params.input_dim, params.hidden, params.out_dim
    w1 = params.w1[:d_in, :hid]; b1 = params.b1[:, :hid]
    w2 = params.w2[:hid, :hid]; b2 = params.b2[:, :hid]
    w3 = params.w3[:hid, :out]; b3 = params.b3[:, :out]
    h1 = jnp.maximum(x @ w1 + b1, 0.0)
    h2 = jnp.maximum(h1 @ w2 + b2, 0.0)
    return h2 @ w3 + b3


if __name__ == "__main__":
    # Shapes implied by the env: num_stocks = 4
    #   input_dim  = num_stocks*2 + 1 = 9
    #   output_dim = sum(nvec) = 4 * 201 = 804
    num_stocks = 4
    input_dim = num_stocks * 2 + 1        # 9
    output_dim = num_stocks * 201         # 804

    key = jax.random.PRNGKey(0)
    k_params, k_x1, k_x2, k_x3 = jax.random.split(key, 4)
    params = init_dqn_params(k_params, input_dim, output_dim)

    def check(x, tag):
        out = jax.block_until_ready(dqn_forward(x, params))
        ref = dqn_reference(x, params)
        assert out.shape == (x.shape[0], output_dim), tag
        assert jnp.allclose(out, ref, atol=1e-3, rtol=1e-4), \
            f"Pallas kernel mismatch vs reference ({tag})"

    # Small-batch path (single grid step, batch rounded to 8 sublanes, partial block).
    x_small = jax.random.uniform(k_x1, (2, input_dim), jnp.float32, 0.0, 100.0)
    check(x_small, "small batch")

    # Multi-tile path (TB=128, 3 tiles, uneven batch -> masked partial last tile).
    x_mid = jax.random.uniform(k_x2, (300, input_dim), jnp.float32, 0.0, 100.0)
    check(x_mid, "mid batch")

    # Large-tile path (TB=512, >=2 tiles for the parallel axis, partial last tile).
    x_big = jax.random.uniform(k_x3, (1200, input_dim), jnp.float32, 0.0, 100.0)
    check(x_big, "big batch")

    print("KERNEL_OK")
</pallas_src>

<mosaic_0001>
module attributes {stable_mosaic.version = 11 : i64} {
  func.func @dqn_kernel(%arg0: i32, %arg1: memref<8x9xf32, #tpu.memory_space<vmem>>, %arg2: memref<128x128xf32, #tpu.memory_space<vmem>>, %arg3: memref<1x128xf32, #tpu.memory_space<vmem>>, %arg4: memref<128x128xf32, #tpu.memory_space<vmem>>, %arg5: memref<1x128xf32, #tpu.memory_space<vmem>>, %arg6: memref<128x896xf32, #tpu.memory_space<vmem>>, %arg7: memref<1x896xf32, #tpu.memory_space<vmem>>, %arg8: memref<8x804xf32, #tpu.memory_space<vmem>>, %arg9: memref<8x128xf32, #tpu.memory_space<vmem>>) attributes {dimension_semantics = [#tpu.dimension_semantics<parallel>], iteration_bounds = array<i64: 1>, scalar_prefetch = 0 : i64, scratch_operands = 1 : i64, tpu.core_type = #tpu.core_type<tc>, window_params = [{transform_indices = @transform_0, window_bounds = array<i64: 8, 9>}, {pipeline_mode = #tpu.pipeline_mode<synchronous>, transform_indices = @transform_1, window_bounds = array<i64: 128, 128>}, {pipeline_mode = #tpu.pipeline_mode<synchronous>, transform_indices = @transform_2, window_bounds = array<i64: 1, 128>}, {pipeline_mode = #tpu.pipeline_mode<synchronous>, transform_indices = @transform_3, window_bounds = array<i64: 128, 128>}, {pipeline_mode = #tpu.pipeline_mode<synchronous>, transform_indices = @transform_4, window_bounds = array<i64: 1, 128>}, {pipeline_mode = #tpu.pipeline_mode<synchronous>, transform_indices = @transform_5, window_bounds = array<i64: 128, 896>}, {pipeline_mode = #tpu.pipeline_mode<synchronous>, transform_indices = @transform_6, window_bounds = array<i64: 1, 896>}, {transform_indices = @transform_7, window_bounds = array<i64: 8, 804>}]} {
    %cst = arith.constant 0.000000e+00 : f32
    %0 = vector.broadcast %cst : f32 to vector<8x128xf32>
    %c0 = arith.constant 0 : index
    %c0_0 = arith.constant 0 : index
    %1 = vector.load %arg9[%c0, %c0_0] : memref<8x128xf32, #tpu.memory_space<vmem>>, vector<8x128xf32>
    tpu.vector_store %arg9[%c0, %c0_0], %0 {strides = array<i32>} : memref<8x128xf32, #tpu.memory_space<vmem>>, vector<8x128xf32>,
    %c0_1 = arith.constant 0 : index
    %c0_2 = arith.constant 0 : index
    %2 = vector.load %arg1[%c0_1, %c0_2] : memref<8x9xf32, #tpu.memory_space<vmem>>, vector<8x9xf32>
    %c0_3 = arith.constant 0 : index
    %c0_4 = arith.constant 0 : index
    %3 = vector.load %arg9[%c0_3, %c0_4] : memref<8x128xf32, #tpu.memory_space<vmem>>, vector<8x9xf32>
    tpu.vector_store %arg9[%c0_3, %c0_4], %2 {strides = array<i32>} : memref<8x128xf32, #tpu.memory_space<vmem>>, vector<8x9xf32>,
    %c0_5 = arith.constant 0 : index
    %c0_6 = arith.constant 0 : index
    %4 = vector.load %arg9[%c0_5, %c0_6] : memref<8x128xf32, #tpu.memory_space<vmem>>, vector<8x128xf32>
    %c0_7 = arith.constant 0 : index
    %c0_8 = arith.constant 0 : index
    %5 = vector.load %arg2[%c0_7, %c0_8] : memref<128x128xf32, #tpu.memory_space<vmem>>, vector<128x128xf32>
    %cst_9 = arith.constant dense<0.000000e+00> : vector<8x128xf32>
    %6 = tpu.matmul %4, %5, %cst_9 {dimension_numbers = #tpu.dot_dimension_numbers<[1], [0], [0], [1], [0, 0, 1, 1], [], []>} : vector<8x128xf32>, vector<128x128xf32>, vector<8x128xf32> -> vector<8x128xf32>
    %c0_10 = arith.constant 0 : index
    %c0_11 = arith.constant 0 : index
    %7 = vector.load %arg3[%c0_10, %c0_11] : memref<1x128xf32, #tpu.memory_space<vmem>>, vector<1x128xf32>
    %8 = vector.broadcast %7 : vector<1x128xf32> to vector<8x128xf32>
    %9 = arith.addf %6, %8 : vector<8x128xf32>
    %cst_12 = arith.constant 0.000000e+00 : f32
    %10 = vector.broadcast %cst_12 : f32 to vector<8x128xf32>
    %11 = arith.maximumf %9, %10 : vector<8x128xf32>
    %c0_13 = arith.constant 0 : index
    %c0_14 = arith.constant 0 : index
    %12 = vector.load %arg4[%c0_13, %c0_14] : memref<128x128xf32, #tpu.memory_space<vmem>>, vector<128x128xf32>
    %cst_15 = arith.constant dense<0.000000e+00> : vector<8x128xf32>
    %13 = tpu.matmul %11, %12, %cst_15 {dimension_numbers = #tpu.dot_dimension_numbers<[1], [0], [0], [1], [0, 0, 1, 1], [], []>} : vector<8x128xf32>, vector<128x128xf32>, vector<8x128xf32> -> vector<8x128xf32>
    %c0_16 = arith.constant 0 : index
    %c0_17 = arith.constant 0 : index
    %14 = vector.load %arg5[%c0_16, %c0_17] : memref<1x128xf32, #tpu.memory_space<vmem>>, vector<1x128xf32>
    %15 = vector.broadcast %14 : vector<1x128xf32> to vector<8x128xf32>
    %16 = arith.addf %13, %15 : vector<8x128xf32>
    %cst_18 = arith.constant 0.000000e+00 : f32
    %17 = vector.broadcast %cst_18 : f32 to vector<8x128xf32>
    %18 = arith.maximumf %16, %17 : vector<8x128xf32>
    %c0_19 = arith.constant 0 : index
    %c0_20 = arith.constant 0 : index
    %19 = vector.load %arg6[%c0_19, %c0_20] : memref<128x896xf32, #tpu.memory_space<vmem>>, vector<128x896xf32>
    %cst_21 = arith.constant dense<0.000000e+00> : vector<8x896xf32>
    %20 = tpu.matmul %18, %19, %cst_21 {dimension_numbers = #tpu.dot_dimension_numbers<[1], [0], [0], [1], [0, 0, 1, 1], [], []>} : vector<8x128xf32>, vector<128x896xf32>, vector<8x896xf32> -> vector<8x896xf32>
    %c0_22 = arith.constant 0 : index
    %c0_23 = arith.constant 0 : index
    %21 = vector.load %arg7[%c0_22, %c0_23] : memref<1x896xf32, #tpu.memory_space<vmem>>, vector<1x896xf32>
    %22 = vector.broadcast %21 : vector<1x896xf32> to vector<8x896xf32>
    %23 = arith.addf %20, %22 : vector<8x896xf32>
    %24 = vector.extract_strided_slice %23 {offsets = [0, 0], sizes = [8, 804], strides = [1, 1]} : vector<8x896xf32> to vector<8x804xf32>
    %c0_24 = arith.constant 0 : index
    %c0_25 = arith.constant 0 : index
    %25 = vector.load %arg8[%c0_24, %c0_25] : memref<8x804xf32, #tpu.memory_space<vmem>>, vector<8x804xf32>
    tpu.vector_store %arg8[%c0_24, %c0_25], %24 {strides = array<i32>} : memref<8x804xf32, #tpu.memory_space<vmem>>, vector<8x804xf32>,
    return
  }
  func.func @transform_0(%arg0: i32) -> (i32, i32) {
    %c0_i32 = arith.constant 0 : i32
    %c0_i32_0 = arith.constant 0 : i32
    return %arg0, %c0_i32 : i32, i32
  }
  func.func @transform_1(%arg0: i32) -> (i32, i32) {
    %c0_i32 = arith.constant 0 : i32
    %c0_i32_0 = arith.constant 0 : i32
    %c0_i32_1 = arith.constant 0 : i32
    return %c0_i32, %c0_i32_0 : i32, i32
  }
  func.func @transform_2(%arg0: i32) -> (i32, i32) {
    %c0_i32 = arith.constant 0 : i32
    %c0_i32_0 = arith.constant 0 : i32
    %c0_i32_1 = arith.constant 0 : i32
    return %c0_i32, %c0_i32_0 : i32, i32
  }
  func.func @transform_3(%arg0: i32) -> (i32, i32) {
    %c0_i32 = arith.constant 0 : i32
    %c0_i32_0 = arith.constant 0 : i32
    %c0_i32_1 = arith.constant 0 : i32
    return %c0_i32, %c0_i32_0 : i32, i32
  }
  func.func @transform_4(%arg0: i32) -> (i32, i32) {
    %c0_i32 = arith.constant 0 : i32
    %c0_i32_0 = arith.constant 0 : i32
    %c0_i32_1 = arith.constant 0 : i32
    return %c0_i32, %c0_i32_0 : i32, i32
  }
  func.func @transform_5(%arg0: i32) -> (i32, i32) {
    %c0_i32 = arith.constant 0 : i32
    %c0_i32_0 = arith.constant 0 : i32
    %c0_i32_1 = arith.constant 0 : i32
    return %c0_i32, %c0_i32_0 : i32, i32
  }
  func.func @transform_6(%arg0: i32) -> (i32, i32) {
    %c0_i32 = arith.constant 0 : i32
    %c0_i32_0 = arith.constant 0 : i32
    %c0_i32_1 = arith.constant 0 : i32
    return %c0_i32, %c0_i32_0 : i32, i32
  }
  func.func @transform_7(%arg0: i32) -> (i32, i32) {
    %c0_i32 = arith.constant 0 : i32
    %c0_i32_0 = arith.constant 0 : i32
    return %arg0, %c0_i32 : i32, i32
  }
}

</mosaic_0001>

<llo_original>
// kernel: tpu_custom_call.1
$region0: #{tpu_custom_call.1}
  #allocation0 [shape = 'u32[]', space=smem, size = 0x4, offset = 0x4, fixed_abs, tag = 'smem constant byte address 0x4 - core index']
  #allocation1 [shape = 'u32[144,128]{1,0:T(1,128)}', space=vmem, size = 0x12000, scoped, tag = 'internal scratch']
  #allocation2 [shape = 'f32[8,128]{1,0:T(8,128)}', space=vmem, size = 0x1000, scoped, tag = 'scratch operand']
  %s0 = inlined_call_operand.hbm [shape: f32[2,9], index: 0, kind: input, shape index: {}]
  %s1 = inlined_call_operand.hbm [shape: f32[128,128], index: 1, kind: input, shape index: {}]
  %s2 = inlined_call_operand.vmem [shape: f32[1,128], index: 2, kind: input, shape index: {}]
  %s3 = inlined_call_operand.hbm [shape: f32[128,128], index: 3, kind: input, shape index: {}]
  %s4 = inlined_call_operand.vmem [shape: f32[1,128], index: 4, kind: input, shape index: {}]
  %s5 = inlined_call_operand.hbm [shape: f32[128,896], index: 5, kind: input, shape index: {}]
  %s6 = inlined_call_operand.vmem [shape: f32[1,896], index: 6, kind: input, shape index: {}]
  %s7 = inlined_call_operand.hbm [shape: f32[2,804], index: 7, kind: output, shape index: {}]
  %s8 = sld [smem:[#allocation0]]
  $region54: #{tpu_custom_call.1} parent=0
    _
  %s10 = ssub.s32 1, %s8
  %s11 = scalar_select 0, %s10, %s8
  $region1: #{tpu_custom_call.1} parent=0
    #allocation3 [shape = 'u8[4096]{0}', space=vmem, size = 0x1000, scoped, tag = 'input window, operand 0, single buffered']
    #allocation4 [shape = 's32[1]{0}', space=sflag, size = 0x4, scoped, tag = 'scoped memory for tpu_custom_call.1']
    #allocation5 [shape = 's32[1]{0}', space=sflag, size = 0x4, scoped, tag = 'scoped memory for tpu_custom_call.1']
    #allocation6 [shape = 'u8[65536]{0}', space=vmem, size = 0x10000, scoped, tag = 'input window, operand 1, single buffered']
    #allocation7 [shape = 's32[1]{0}', space=sflag, size = 0x4, scoped, tag = 'scoped memory for tpu_custom_call.1']
    #allocation8 [shape = 'u8[65536]{0}', space=vmem, size = 0x10000, scoped, tag = 'input window, operand 3, single buffered']
    #allocation9 [shape = 'u8[458752]{0}', space=vmem, size = 0x70000, scoped, tag = 'input window, operand 5, single buffered']
    #allocation10 [shape = 's32[1]{0}', space=sflag, size = 0x4, scoped, tag = 'scoped memory for tpu_custom_call.1']
    #allocation11 [shape = 'u8[28672]{0}', space=vmem, size = 0x7000, scoped, tag = 'output window, operand 0, single buffered']
    %12 = vsyncpa [#allocation4], 0
    %13 = vsyncpa [#allocation7], 0
    %14 = vsyncpa [#allocation10], 0
    %15 = vsyncpa [#allocation5], 0
    // Predicated region
    $region2: #{tpu_custom_call.1} parent=1 // pred_check
      _
    $region3: #{tpu_custom_call.1} parent=1 // pred_check_branch
      %17 = sbr.rel (0) target = $region5
    $region4: #{tpu_custom_call.1} parent=1 // pred_region
      %s19 = ssub.s32 128, 32
      %20 = vsyncadd [#allocation4], %s19
      %s21 = sshll.u32 [#allocation3], 4
      %s22 = int_to_ptr.vmem [resolvable:$true] %s21
      %27 = dma.hbm_to_vmem [thread:$0]  %s0, 32, %s22, [#allocation4], 32, 32, 2
    $region5: #{tpu_custom_call.1} parent=1 // pred_fallthru
      _
    // Predicated region
    $region6: #{tpu_custom_call.1} parent=1 // pred_check
      _
    $region7: #{tpu_custom_call.1} parent=1 // pred_check_branch
      %29 = sbr.rel (0) target = $region9
    $region8: #{tpu_custom_call.1} parent=1 // pred_region
      %s31 = ssub.s32 2048, 2048
      %32 = vsyncadd [#allocation7], %s31
      %s33 = sshll.u32 [#allocation6], 4
      %s34 = int_to_ptr.vmem [resolvable:$true] %s33
      %39 = dma.hbm_to_vmem [thread:$0]  %s1, 2048, %s34, [#allocation7], 128, 128, 8
    $region9: #{tpu_custom_call.1} parent=1 // pred_fallthru
      _
    // Predicated region
    $region10: #{tpu_custom_call.1} parent=1 // pred_check
      _
    $region11: #{tpu_custom_call.1} parent=1 // pred_check_branch
      %41 = sbr.rel (0) target = $region13
    $region12: #{tpu_custom_call.1} parent=1 // pred_region
      _
    $region13: #{tpu_custom_call.1} parent=1 // pred_fallthru
      _
    // Predicated region
    $region14: #{tpu_custom_call.1} parent=1 // pred_check
      _
    $region15: #{tpu_custom_call.1} parent=1 // pred_check_branch
      %43 = sbr.rel (0) target = $region17
    $region16: #{tpu_custom_call.1} parent=1 // pred_region
      %s45 = ssub.s32 2048, 2048
      %46 = vsyncadd [#allocation7], %s45
      %s47 = sshll.u32 [#allocation8], 4
      %s48 = int_to_ptr.vmem [resolvable:$true] %s47
      %53 = dma.hbm_to_vmem [thread:$0]  %s3, 2048, %s48, [#allocation7], 128, 128, 8
    $region17: #{tpu_custom_call.1} parent=1 // pred_fallthru
      _
    // Predicated region
    $region18: #{tpu_custom_call.1} parent=1 // pred_check
      _
    $region19: #{tpu_custom_call.1} parent=1 // pred_check_branch
      %55 = sbr.rel (0) target = $region21
    $region20: #{tpu_custom_call.1} parent=1 // pred_region
      _
    $region21: #{tpu_custom_call.1} parent=1 // pred_fallthru
      _
    // Predicated region
    $region22: #{tpu_custom_call.1} parent=1 // pred_check
      _
    $region23: #{tpu_custom_call.1} parent=1 // pred_check_branch
      %57 = sbr.rel (0) target = $region25
    $region24: #{tpu_custom_call.1} parent=1 // pred_region
      %s59 = ssub.s32 14336, 14336
      %60 = vsyncadd [#allocation10], %s59
      %s61 = sshll.u32 [#allocation9], 4
      %s62 = int_to_ptr.vmem [resolvable:$true] %s61
      %67 = dma.hbm_to_vmem [thread:$0]  %s5, 14336, %s62, [#allocation10], 896, 896, 56
    $region25: #{tpu_custom_call.1} parent=1 // pred_fallthru
      _
    // Predicated region
    $region26: #{tpu_custom_call.1} parent=1 // pred_check
      _
    $region27: #{tpu_custom_call.1} parent=1 // pred_check_branch
      %69 = sbr.rel (0) target = $region29
    $region28: #{tpu_custom_call.1} parent=1 // pred_region
      _
    $region29: #{tpu_custom_call.1} parent=1 // pred_fallthru
      _
    // Predicated region
    $region30: #{tpu_custom_call.1} parent=1 // pred_check
      _
    $region31: #{tpu_custom_call.1} parent=1 // pred_check_branch
      %71 = sbr.rel (0) target = $region33
    $region32: #{tpu_custom_call.1} parent=1 // pred_region
      %72 = dma.done [#allocation4], 128
    $region33: #{tpu_custom_call.1} parent=1 // pred_fallthru
      _
    // Predicated region
    $region34: #{tpu_custom_call.1} parent=1 // pred_check
      _
    $region35: #{tpu_custom_call.1} parent=1 // pred_check_branch
      %74 = sbr.rel (0) target = $region37
    $region36: #{tpu_custom_call.1} parent=1 // pred_region
      %75 = dma.done [#allocation7], 2048
    $region37: #{tpu_custom_call.1} parent=1 // pred_fallthru
      _
    // Predicated region
    $region38: #{tpu_custom_call.1} parent=1 // pred_check
      _
    $region39: #{tpu_custom_call.1} parent=1 // pred_check_branch
      %77 = sbr.rel (0) target = $region41
    $region40: #{tpu_custom_call.1} parent=1 // pred_region
      %78 = dma.done [#allocation7], 2048
    $region41: #{tpu_custom_call.1} parent=1 // pred_fallthru
      _
    // Predicated region
    $region42: #{tpu_custom_call.1} parent=1 // pred_check
      _
    $region43: #{tpu_custom_call.1} parent=1 // pred_check_branch
      %80 = sbr.rel (0) target = $region45
    $region44: #{tpu_custom_call.1} parent=1 // pred_region
      %81 = dma.done [#allocation10], 14336
    $region45: #{tpu_custom_call.1} parent=1 // pred_fallthru
      _
    %82 = vst [vmem:[#allocation2] sm:$0xff] 0.0
    %v83 = vld [vmem:[#allocation3] sm:$0xff]
    %vm84 = vcmask 72704
    %85 = vst.msk [vmem:[#allocation2] sm:$0xff] %vm84, %v83
    %v86 = vld [vmem:[#allocation2] sm:$0xff]
    %v87 = vld [vmem:[#allocation6] sm:$0xff]
    %v88 = vld [vmem:[#allocation6 + $0x8] sm:$0xff]
    %v89 = vld [vmem:[#allocation6 + $0x10] sm:$0xff]
    %v90 = vld [vmem:[#allocation6 + $0x18] sm:$0xff]
    %v91 = vld [vmem:[#allocation6 + $0x20] sm:$0xff]
    %v92 = vld [vmem:[#allocation6 + $0x28] sm:$0xff]
    %v93 = vld [vmem:[#allocation6 + $0x30] sm:$0xff]
    %v94 = vld [vmem:[#allocation6 + $0x38] sm:$0xff]
    %v95 = vld [vmem:[#allocation6 + $0x40] sm:$0xff]
    %v96 = vld [vmem:[#allocation6 + $0x48] sm:$0xff]
    %v97 = vld [vmem:[#allocation6 + $0x50] sm:$0xff]
    %v98 = vld [vmem:[#allocation6 + $0x58] sm:$0xff]
    %v99 = vld [vmem:[#allocation6 + $0x60] sm:$0xff]
    %v100 = vld [vmem:[#allocation6 + $0x68] sm:$0xff]
    %v101 = vld [vmem:[#allocation6 + $0x70] sm:$0xff]
    %v102 = vld [vmem:[#allocation6 + $0x78] sm:$0xff]
    %v103 = vld [vmem:[%s2] sm:$0x1]
    %v105 = vlaneseq
    %v106 = vshrl.u32 %v105, 7
    %v107 = vsub.s32 0, %v106
    %v108 = vrot.slane %v103, %v107
    %110 = vmatprep.subr.mxu0 0.0
    %111 = vmatpush1.msra.mxu0 %v102
    %112 = vmatprep.subr.mxu0 0.0
    %113 = vmatpush1.msra.mxu0 %v101
    %114 = vmatprep.subr.mxu0 0.0
    %115 = vmatpush1.msra.mxu0 %v100
    %116 = vmatprep.subr.mxu0 0.0
    %117 = vmatpush1.msra.mxu0 %v99
    %118 = vmatprep.subr.mxu0 0.0
    %119 = vmatpush1.msra.mxu0 %v98
    %120 = vmatprep.subr.mxu0 0.0
    %121 = vmatpush1.msra.mxu0 %v97
    %122 = vmatprep.subr.mxu0 0.0
    %123 = vmatpush1.msra.mxu0 %v96
    %124 = vmatprep.subr.mxu0 0.0
    %125 = vmatpush1.msra.mxu0 %v95
    %126 = vmatprep.subr.mxu0 0.0
    %127 = vmatpush1.msra.mxu0 %v94
    %128 = vmatprep.subr.mxu0 0.0
    %129 = vmatpush1.msra.mxu0 %v93
    %130 = vmatprep.subr.mxu0 0.0
    %131 = vmatpush1.msra.mxu0 %v92
    %132 = vmatprep.subr.mxu0 0.0
    %133 = vmatpush1.msra.mxu0 %v91
    %134 = vmatprep.subr.mxu0 0.0
    %135 = vmatpush1.msra.mxu0 %v90
    %136 = vmatprep.subr.mxu0 0.0
    %137 = vmatpush1.msra.mxu0 %v89
    %138 = vmatprep.subr.mxu0 0.0
    %139 = vmatpush1.msra.mxu0 %v88
    %140 = vmatprep.subr.mxu0 0.0
    %141 = vmatpush1.msra.mxu0 %v87
    %142 = vmatprep.subr.mxu0 0.0
    %143 = vmatpush2.msra.mxu0 0.0
    %144 = vmatprep.subr.mxu0 0.0
    %145 = vmatpush2.msra.mxu0 0.0
    %146 = vmatprep.subr.mxu0 0.0
    %147 = vmatpush2.msra.mxu0 0.0
    %148 = vmatprep.subr.mxu0 0.0
    %149 = vmatpush2.msra.mxu0 0.0
    %150 = vmatprep.subr.mxu0 0.0
    %151 = vmatpush2.msra.mxu0 0.0
    %152 = vmatprep.subr.mxu0 0.0
    %153 = vmatpush2.msra.mxu0 0.0
    %154 = vmatprep.subr.mxu0 0.0
    %155 = vmatpush2.msra.mxu0 0.0
    %156 = vmatprep.subr.mxu0 0.0
    %157 = vmatpush2.msra.mxu0 0.0
    %158 = vmatprep.subr.mxu0 0.0
    %159 = vmatpush2.msra.mxu0 0.0
    %160 = vmatprep.subr.mxu0 0.0
    %161 = vmatpush2.msra.mxu0 0.0
    %162 = vmatprep.subr.mxu0 0.0
    %163 = vmatpush2.msra.mxu0 0.0
    %164 = vmatprep.subr.mxu0 0.0
    %165 = vmatpush2.msra.mxu0 0.0
    %166 = vmatprep.subr.mxu0 0.0
    %167 = vmatpush2.msra.mxu0 0.0
    %168 = vmatprep.subr.mxu0 0.0
    %169 = vmatpush2.msra.mxu0 0.0
    %170 = vmatprep.subr.mxu0 0.0
    %171 = vmatpush2.msra.mxu0 0.0
    %172 = vmatprep.subr.mxu0 0.0
    %173 = vmatpush2.msra.mxu0 0.0
    %174 = vmatprep.mubr.f32.mxu0 0.0
    %175 = vmatmul.mubr.f32.gmra.mxu0 %v86
    %v176 = vpop.f32.mrf.mxu0
    %v177 = vadd.f32 %v108, %v176
    %v178 = vpop.f32.mrf.mxu0
    %179 = vdwg.mxu0
    %v180 = vmax.f32 %v177, 0.0
    %v181 = vld [vmem:[#allocation8] sm:$0xff]
    %v182 = vld [vmem:[#allocation8 + $0x8] sm:$0xff]
    %v183 = vld [vmem:[#allocation8 + $0x10] sm:$0xff]
    %v184 = vld [vmem:[#allocation8 + $0x18] sm:$0xff]
    %v185 = vld [vmem:[#allocation8 + $0x20] sm:$0xff]
    %v186 = vld [vmem:[#allocation8 + $0x28] sm:$0xff]
    %v187 = vld [vmem:[#allocation8 + $0x30] sm:$0xff]
    %v188 = vld [vmem:[#allocation8 + $0x38] sm:$0xff]
    %v189 = vld [vmem:[#allocation8 + $0x40] sm:$0xff]
    %v190 = vld [vmem:[#allocation8 + $0x48] sm:$0xff]
    %v191 = vld [vmem:[#allocation8 + $0x50] sm:$0xff]
    %v192 = vld [vmem:[#allocation8 + $0x58] sm:$0xff]
    %v193 = vld [vmem:[#allocation8 + $0x60] sm:$0xff]
    %v194 = vld [vmem:[#allocation8 + $0x68] sm:$0xff]
    %v195 = vld [vmem:[#allocation8 + $0x70] sm:$0xff]
    %v196 = vld [vmem:[#allocation8 + $0x78] sm:$0xff]
    %v197 = vld [vmem:[%s4] sm:$0x1]
    %v199 = vlaneseq
    %v200 = vshrl.u32 %v199, 7
    %v201 = vsub.s32 0, %v200
    %v202 = vrot.slane %v197, %v201
    %204 = vmatprep.subr.mxu0 0.0
    %205 = vmatpush1.msra.mxu0 %v196
    %206 = vmatprep.subr.mxu0 0.0
    %207 = vmatpush1.msra.mxu0 %v195
    %208 = vmatprep.subr.mxu0 0.0
    %209 = vmatpush1.msra.mxu0 %v194
    %210 = vmatprep.subr.mxu0 0.0
    %211 = vmatpush1.msra.mxu0 %v193
    %212 = vmatprep.subr.mxu0 0.0
    %213 = vmatpush1.msra.mxu0 %v192
    %214 = vmatprep.subr.mxu0 0.0
    %215 = vmatpush1.msra.mxu0 %v191
    %216 = vmatprep.subr.mxu0 0.0
    %217 = vmatpush1.msra.mxu0 %v190
    %218 = vmatprep.subr.mxu0 0.0
    %219 = vmatpush1.msra.mxu0 %v189
    %220 = vmatprep.subr.mxu0 0.0
    %221 = vmatpush1.msra.mxu0 %v188
    %222 = vmatprep.subr.mxu0 0.0
    %223 = vmatpush1.msra.mxu0 %v187
    %224 = vmatprep.subr.mxu0 0.0
    %225 = vmatpush1.msra.mxu0 %v186
    %226 = vmatprep.subr.mxu0 0.0
    %227 = vmatpush1.msra.mxu0 %v185
    %228 = vmatprep.subr.mxu0 0.0
    %229 = vmatpush1.msra.mxu0 %v184
    %230 = vmatprep.subr.mxu0 0.0
    %231 = vmatpush1.msra.mxu0 %v183
    %232 = vmatprep.subr.mxu0 0.0
    %233 = vmatpush1.msra.mxu0 %v182
    %234 = vmatprep.subr.mxu0 0.0
    %235 = vmatpush1.msra.mxu0 %v181
    %236 = vmatprep.subr.mxu0 0.0
    %237 = vmatpush2.msra.mxu0 0.0
    %238 = vmatprep.subr.mxu0 0.0
    %239 = vmatpush2.msra.mxu0 0.0
    %240 = vmatprep.subr.mxu0 0.0
    %241 = vmatpush2.msra.mxu0 0.0
    %242 = vmatprep.subr.mxu0 0.0
    %243 = vmatpush2.msra.mxu0 0.0
    %244 = vmatprep.subr.mxu0 0.0
    %245 = vmatpush2.msra.mxu0 0.0
    %246 = vmatprep.subr.mxu0 0.0
    %247 = vmatpush2.msra.mxu0 0.0
    %248 = vmatprep.subr.mxu0 0.0
    %249 = vmatpush2.msra.mxu0 0.0
    %250 = vmatprep.subr.mxu0 0.0
    %251 = vmatpush2.msra.mxu0 0.0
    %252 = vmatprep.subr.mxu0 0.0
    %253 = vmatpush2.msra.mxu0 0.0
    %254 = vmatprep.subr.mxu0 0.0
    %255 = vmatpush2.msra.mxu0 0.0
    %256 = vmatprep.subr.mxu0 0.0
    %257 = vmatpush2.msra.mxu0 0.0
    %258 = vmatprep.subr.mxu0 0.0
    %259 = vmatpush2.msra.mxu0 0.0
    %260 = vmatprep.subr.mxu0 0.0
    %261 = vmatpush2.msra.mxu0 0.0
    %262 = vmatprep.subr.mxu0 0.0
    %263 = vmatpush2.msra.mxu0 0.0
    %264 = vmatprep.subr.mxu0 0.0
    %265 = vmatpush2.msra.mxu0 0.0
    %266 = vmatprep.subr.mxu0 0.0
    %267 = vmatpush2.msra.mxu0 0.0
    %268 = vmatprep.mubr.f32.mxu0 0.0
    %269 = vmatmul.mubr.f32.gmra.mxu0 %v180
    %v270 = vpop.f32.mrf.mxu0
    %v271 = vadd.f32 %v202, %v270
    %v272 = vpop.f32.mrf.mxu0
    %273 = vdwg.mxu0
    %v274 = vmax.f32 %v271, 0.0
    %v275 = vld [vmem:[#allocation9] sm:$0xff]
    %v276 = vld [vmem:[#allocation9 + $0x8] sm:$0xff]
    %v277 = vld [vmem:[#allocation9 + $0x10] sm:$0xff]
    %v278 = vld [vmem:[#allocation9 + $0x18] sm:$0xff]
    %v279 = vld [vmem:[#allocation9 + $0x20] sm:$0xff]
    %v280 = vld [vmem:[#allocation9 + $0x28] sm:$0xff]
    %v281 = vld [vmem:[#allocation9 + $0x30] sm:$0xff]
    %v282 = vld [vmem:[#allocation9 + $0x38] sm:$0xff]
    %v283 = vld [vmem:[#allocation9 + $0x40] sm:$0xff]
    %v284 = vld [vmem:[#allocation9 + $0x48] sm:$0xff]
    %v285 = vld [vmem:[#allocation9 + $0x50] sm:$0xff]
    %v286 = vld [vmem:[#allocation9 + $0x58] sm:$0xff]
    %v287 = vld [vmem:[#allocation9 + $0x60] sm:$0xff]
    %v288 = vld [vmem:[#allocation9 + $0x68] sm:$0xff]
    %v289 = vld [vmem:[#allocation9 + $0x70] sm:$0xff]
    %v290 = vld [vmem:[#allocation9 + $0x78] sm:$0xff]
    %v291 = vld [vmem:[#allocation9 + $0x80] sm:$0xff]
    %v292 = vld [vmem:[#allocation9 + $0x88] sm:$0xff]
    %v293 = vld [vmem:[#allocation9 + $0x90] sm:$0xff]
    %v294 = vld [vmem:[#allocation9 + $0x98] sm:$0xff]
    %v295 = vld [vmem:[#allocation9 + $0xa0] sm:$0xff]
    %v296 = vld [vmem:[#allocation9 + $0xa8] sm:$0xff]
    %v297 = vld [vmem:[#allocation9 + $0xb0] sm:$0xff]
    %v298 = vld [vmem:[#allocation9 + $0xb8] sm:$0xff]
    %v299 = vld [vmem:[#allocation9 + $0xc0] sm:$0xff]
    %v300 = vld [vmem:[#allocation9 + $0xc8] sm:$0xff]
    %v301 = vld [vmem:[#allocation9 + $0xd0] sm:$0xff]
    %v302 = vld [vmem:[#allocation9 + $0xd8] sm:$0xff]
    %v303 = vld [vmem:[#allocation9 + $0xe0] sm:$0xff]
    %v304 = vld [vmem:[#allocation9 + $0xe8] sm:$0xff]
    %v305 = vld [vmem:[#allocation9 + $0xf0] sm:$0xff]
    %v306 = vld [vmem:[#allocation9 + $0xf8] sm:$0xff]
    %v307 = vld [vmem:[#allocation9 + $0x100] sm:$0xff]
    %v308 = vld [vmem:[#allocation9 + $0x108] sm:$0xff]
    %v309 = vld [vmem:[#allocation9 + $0x110] sm:$0xff]
    %v310 = vld [vmem:[#allocation9 + $0x118] sm:$0xff]
    %v311 = vld [vmem:[#allocation9 + $0x120] sm:$0xff]
    %v312 = vld [vmem:[#allocation9 + $0x128] sm:$0xff]
    %v313 = vld [vmem:[#allocation9 + $0x130] sm:$0xff]
    %v314 = vld [vmem:[#allocation9 + $0x138] sm:$0xff]
    %v315 = vld [vmem:[#allocation9 + $0x140] sm:$0xff]
    %v316 = vld [vmem:[#allocation9 + $0x148] sm:$0xff]
    %v317 = vld [vmem:[#allocation9 + $0x150] sm:$0xff]
    %v318 = vld [vmem:[#allocation9 + $0x158] sm:$0xff]
    %v319 = vld [vmem:[#allocation9 + $0x160] sm:$0xff]
    %v320 = vld [vmem:[#allocation9 + $0x168] sm:$0xff]
    %v321 = vld [vmem:[#allocation9 + $0x170] sm:$0xff]
    %v322 = vld [vmem:[#allocation9 + $0x178] sm:$0xff]
    %v323 = vld [vmem:[#allocation9 + $0x180] sm:$0xff]
    %v324 = vld [vmem:[#allocation9 + $0x188] sm:$0xff]
    %v325 = vld [vmem:[#allocation9 + $0x190] sm:$0xff]
    %v326 = vld [vmem:[#allocation9 + $0x198] sm:$0xff]
    %v327 = vld [vmem:[#allocation9 + $0x1a0] sm:$0xff]
    %v328 = vld [vmem:[#allocation9 + $0x1a8] sm:$0xff]
    %v329 = vld [vmem:[#allocation9 + $0x1b0] sm:$0xff]
    %v330 = vld [vmem:[#allocation9 + $0x1b8] sm:$0xff]
    %v331 = vld [vmem:[#allocation9 + $0x1c0] sm:$0xff]
    %v332 = vld [vmem:[#allocation9 + $0x1c8] sm:$0xff]
    %v333 = vld [vmem:[#allocation9 + $0x1d0] sm:$0xff]
    %v334 = vld [vmem:[#allocation9 + $0x1d8] sm:$0xff]
    %v335 = vld [vmem:[#allocation9 + $0x1e0] sm:$0xff]
    %v336 = vld [vmem:[#allocation9 + $0x1e8] sm:$0xff]
    %v337 = vld [vmem:[#allocation9 + $0x1f0] sm:$0xff]
    %v338 = vld [vmem:[#allocation9 + $0x1f8] sm:$0xff]
    %v339 = vld [vmem:[#allocation9 + $0x200] sm:$0xff]
    %v340 = vld [vmem:[#allocation9 + $0x208] sm:$0xff]
    %v341 = vld [vmem:[#allocation9 + $0x210] sm:$0xff]
    %v342 = vld [vmem:[#allocation9 + $0x218] sm:$0xff]
    %v343 = vld [vmem:[#allocation9 + $0x220] sm:$0xff]
    %v344 = vld [vmem:[#allocation9 + $0x228] sm:$0xff]
    %v345 = vld [vmem:[#allocation9 + $0x230] sm:$0xff]
    %v346 = vld [vmem:[#allocation9 + $0x238] sm:$0xff]
    %v347 = vld [vmem:[#allocation9 + $0x240] sm:$0xff]
    %v348 = vld [vmem:[#allocation9 + $0x248] sm:$0xff]
    %v349 = vld [vmem:[#allocation9 + $0x250] sm:$0xff]
    %v350 = vld [vmem:[#allocation9 + $0x258] sm:$0xff]
    %v351 = vld [vmem:[#allocation9 + $0x260] sm:$0xff]
    %v352 = vld [vmem:[#allocation9 + $0x268] sm:$0xff]
    %v353 = vld [vmem:[#allocation9 + $0x270] sm:$0xff]
    %v354 = vld [vmem:[#allocation9 + $0x278] sm:$0xff]
    %v355 = vld [vmem:[#allocation9 + $0x280] sm:$0xff]
    %v356 = vld [vmem:[#allocation9 + $0x288] sm:$0xff]
    %v357 = vld [vmem:[#allocation9 + $0x290] sm:$0xff]
    %v358 = vld [vmem:[#allocation9 + $0x298] sm:$0xff]
    %v359 = vld [vmem:[#allocation9 + $0x2a0] sm:$0xff]
    %v360 = vld [vmem:[#allocation9 + $0x2a8] sm:$0xff]
    %v361 = vld [vmem:[#allocation9 + $0x2b0] sm:$0xff]
    %v362 = vld [vmem:[#allocation9 + $0x2b8] sm:$0xff]
    %v363 = vld [vmem:[#allocation9 + $0x2c0] sm:$0xff]
    %v364 = vld [vmem:[#allocation9 + $0x2c8] sm:$0xff]
    %v365 = vld [vmem:[#allocation9 + $0x2d0] sm:$0xff]
    %v366 = vld [vmem:[#allocation9 + $0x2d8] sm:$0xff]
    %v367 = vld [vmem:[#allocation9 + $0x2e0] sm:$0xff]
    %v368 = vld [vmem:[#allocation9 + $0x2e8] sm:$0xff]
    %v369 = vld [vmem:[#allocation9 + $0x2f0] sm:$0xff]
    %v370 = vld [vmem:[#allocation9 + $0x2f8] sm:$0xff]
    %v371 = vld [vmem:[#allocation9 + $0x300] sm:$0xff]
    %v372 = vld [vmem:[#allocation9 + $0x308] sm:$0xff]
    %v373 = vld [vmem:[#allocation9 + $0x310] sm:$0xff]
    %v374 = vld [vmem:[#allocation9 + $0x318] sm:$0xff]
    %v375 = vld [vmem:[#allocation9 + $0x320] sm:$0xff]
    %v376 = vld [vmem:[#allocation9 + $0x328] sm:$0xff]
    %v377 = vld [vmem:[#allocation9 + $0x330] sm:$0xff]
    %v378 = vld [vmem:[#allocation9 + $0x338] sm:$0xff]
    %v379 = vld [vmem:[#allocation9 + $0x340] sm:$0xff]
    %v380 = vld [vmem:[#allocation9 + $0x348] sm:$0xff]
    %v381 = vld [vmem:[#allocation9 + $0x350] sm:$0xff]
    %v382 = vld [vmem:[#allocation9 + $0x358] sm:$0xff]
    %v383 = vld [vmem:[#allocation9 + $0x360] sm:$0xff]
    %v384 = vld [vmem:[#allocation9 + $0x368] sm:$0xff]
    %v385 = vld [vmem:[#allocation9 + $0x370] sm:$0xff]
    %v386 = vld [vmem:[#allocation9 + $0x378] sm:$0xff]
    %v387 = vld [vmem:[%s6] sm:$0xff]
    %v389 = vlaneseq
    %v390 = vshrl.u32 %v389, 7
    %v391 = vsub.s32 0, %v390
    %v392 = vrot.slane %v387, %v391
    %v393 = vlaneseq
    %v394 = vshrl.u32 %v393, 7
    %v395 = vsub.s32 1, %v394
    %v396 = vrot.slane %v387, %v395
    %v397 = vlaneseq
    %v398 = vshrl.u32 %v397, 7
    %v399 = vsub.s32 2, %v398
    %v400 = vrot.slane %v387, %v399
    %v401 = vlaneseq
    %v402 = vshrl.u32 %v401, 7
    %v403 = vsub.s32 3, %v402
    %v404 = vrot.slane %v387, %v403
    %v405 = vlaneseq
    %v406 = vshrl.u32 %v405, 7
    %v407 = vsub.s32 4, %v406
    %v408 = vrot.slane %v387, %v407
    %v409 = vlaneseq
    %v410 = vshrl.u32 %v409, 7
    %v411 = vsub.s32 5, %v410
    %v412 = vrot.slane %v387, %v411
    %v413 = vlaneseq
    %v414 = vshrl.u32 %v413, 7
    %v415 = vsub.s32 6, %v414
    %v416 = vrot.slane %v387, %v415
    %424 = vmatprep.subr.mxu0 %v381
    %425 = vmatpush1.msra.mxu0 %v380
    %426 = vmatprep.subr.mxu0 %v374
    %427 = vmatpush1.msra.mxu0 %v373
    %428 = vmatprep.subr.mxu0 %v367
    %429 = vmatpush1.msra.mxu0 %v366
    %430 = vmatprep.subr.mxu0 %v360
    %431 = vmatpush1.msra.mxu0 %v359
    %432 = vmatprep.subr.mxu0 %v353
    %433 = vmatpush1.msra.mxu0 %v352
    %434 = vmatprep.subr.mxu0 %v346
    %435 = vmatpush1.msra.mxu0 %v345
    %436 = vmatprep.subr.mxu0 %v339
    %437 = vmatpush1.msra.mxu0 %v338
    %438 = vmatprep.subr.mxu0 %v332
    %439 = vmatpush1.msra.mxu0 %v331
    %440 = vmatprep.subr.mxu0 %v325
    %441 = vmatpush1.msra.mxu0 %v324
    %442 = vmatprep.subr.mxu0 %v318
    %443 = vmatpush1.msra.mxu0 %v317
    %444 = vmatprep.subr.mxu0 %v311
    %445 = vmatpush1.msra.mxu0 %v310
    %446 = vmatprep.subr.mxu0 %v304
    %447 = vmatpush1.msra.mxu0 %v303
    %448 = vmatprep.subr.mxu0 %v297
    %449 = vmatpush1.msra.mxu0 %v296
    %450 = vmatprep.subr.mxu0 %v290
    %451 = vmatpush1.msra.mxu0 %v289
    %452 = vmatprep.subr.mxu0 %v283
    %453 = vmatpush1.msra.mxu0 %v282
    %454 = vmatprep.subr.mxu0 %v276
    %455 = vmatpush1.msra.mxu0 %v275
    %456 = vmatprep.subr.mxu0 0.0
    %457 = vmatpush2.msra.mxu0 0.0
    %458 = vmatprep.subr.mxu0 0.0
    %459 = vmatpush2.msra.mxu0 0.0
    %460 = vmatprep.subr.mxu0 0.0
    %461 = vmatpush2.msra.mxu0 0.0
    %462 = vmatprep.subr.mxu0 0.0
    %463 = vmatpush2.msra.mxu0 0.0
    %464 = vmatprep.subr.mxu0 0.0
    %465 = vmatpush2.msra.mxu0 0.0
    %466 = vmatprep.subr.mxu0 0.0
    %467 = vmatpush2.msra.mxu0 0.0
    %468 = vmatprep.subr.mxu0 0.0
    %469 = vmatpush2.msra.mxu0 0.0
    %470 = vmatprep.subr.mxu0 0.0
    %471 = vmatpush2.msra.mxu0 0.0
    %472 = vmatprep.subr.mxu0 0.0
    %473 = vmatpush2.msra.mxu0 0.0
    %474 = vmatprep.subr.mxu0 0.0
    %475 = vmatpush2.msra.mxu0 0.0
    %476 = vmatprep.subr.mxu0 0.0
    %477 = vmatpush2.msra.mxu0 0.0
    %478 = vmatprep.subr.mxu0 0.0
    %479 = vmatpush2.msra.mxu0 0.0
    %480 = vmatprep.subr.mxu0 0.0
    %481 = vmatpush2.msra.mxu0 0.0
    %482 = vmatprep.subr.mxu0 0.0
    %483 = vmatpush2.msra.mxu0 0.0
    %484 = vmatprep.subr.mxu0 0.0
    %485 = vmatpush2.msra.mxu0 0.0
    %486 = vmatprep.subr.mxu0 0.0
    %487 = vmatpush2.msra.mxu0 0.0
    %488 = vmatprep.mubr.f32.mxu0 0.0
    %489 = vmatmul.mubr.f32.gmra.mxu0 %v274
    %v490 = vpop.f32.mrf.mxu0
    %v491 = vadd.f32 %v392, %v490
    %v492 = vpop.f32.mrf.mxu0
    %v493 = vadd.f32 %v396, %v492
    %494 = vdwg.mxu0
    %495 = vmatprep.subr.mxu0 %v383
    %496 = vmatpush1.msra.mxu0 %v382
    %497 = vmatprep.subr.mxu0 %v376
    %498 = vmatpush1.msra.mxu0 %v375
    %499 = vmatprep.subr.mxu0 %v369
    %500 = vmatpush1.msra.mxu0 %v368
    %501 = vmatprep.subr.mxu0 %v362
    %502 = vmatpush1.msra.mxu0 %v361
    %503 = vmatprep.subr.mxu0 %v355
    %504 = vmatpush1.msra.mxu0 %v354
    %505 = vmatprep.subr.mxu0 %v348
    %506 = vmatpush1.msra.mxu0 %v347
    %507 = vmatprep.subr.mxu0 %v341
    %508 = vmatpush1.msra.mxu0 %v340
    %509 = vmatprep.subr.mxu0 %v334
    %510 = vmatpush1.msra.mxu0 %v333
    %511 = vmatprep.subr.mxu0 %v327
    %512 = vmatpush1.msra.mxu0 %v326
    %513 = vmatprep.subr.mxu0 %v320
    %514 = vmatpush1.msra.mxu0 %v319
    %515 = vmatprep.subr.mxu0 %v313
    %516 = vmatpush1.msra.mxu0 %v312
    %517 = vmatprep.subr.mxu0 %v306
    %518 = vmatpush1.msra.mxu0 %v305
    %519 = vmatprep.subr.mxu0 %v299
    %520 = vmatpush1.msra.mxu0 %v298
    %521 = vmatprep.subr.mxu0 %v292
    %522 = vmatpush1.msra.mxu0 %v291
    %523 = vmatprep.subr.mxu0 %v285
    %524 = vmatpush1.msra.mxu0 %v284
    %525 = vmatprep.subr.mxu0 %v278
    %526 = vmatpush1.msra.mxu0 %v277
    %527 = vmatprep.subr.mxu0 0.0
    %528 = vmatpush2.msra.mxu0 0.0
    %529 = vmatprep.subr.mxu0 0.0
    %530 = vmatpush2.msra.mxu0 0.0
    %531 = vmatprep.subr.mxu0 0.0
    %532 = vmatpush2.msra.mxu0 0.0
    %533 = vmatprep.subr.mxu0 0.0
    %534 = vmatpush2.msra.mxu0 0.0
    %535 = vmatprep.subr.mxu0 0.0
    %536 = vmatpush2.msra.mxu0 0.0
    %537 = vmatprep.subr.mxu0 0.0
    %538 = vmatpush2.msra.mxu0 0.0
    %539 = vmatprep.subr.mxu0 0.0
    %540 = vmatpush2.msra.mxu0 0.0
    %541 = vmatprep.subr.mxu0 0.0
    %542 = vmatpush2.msra.mxu0 0.0
    %543 = vmatprep.subr.mxu0 0.0
    %544 = vmatpush2.msra.mxu0 0.0
    %545 = vmatprep.subr.mxu0 0.0
    %546 = vmatpush2.msra.mxu0 0.0
    %547 = vmatprep.subr.mxu0 0.0
    %548 = vmatpush2.msra.mxu0 0.0
    %549 = vmatprep.subr.mxu0 0.0
    %550 = vmatpush2.msra.mxu0 0.0
    %551 = vmatprep.subr.mxu0 0.0
    %552 = vmatpush2.msra.mxu0 0.0
    %553 = vmatprep.subr.mxu0 0.0
    %554 = vmatpush2.msra.mxu0 0.0
    %555 = vmatprep.subr.mxu0 0.0
    %556 = vmatpush2.msra.mxu0 0.0
    %557 = vmatprep.subr.mxu0 0.0
    %558 = vmatpush2.msra.mxu0 0.0
    %559 = vmatprep.mubr.f32.mxu0 0.0
    %560 = vmatmul.mubr.f32.gmra.mxu0 %v274
    %v561 = vpop.f32.mrf.mxu0
    %v562 = vadd.f32 %v400, %v561
    %v563 = vpop.f32.mrf.mxu0
    %v564 = vadd.f32 %v404, %v563
    %565 = vdwg.mxu0
    %566 = vmatprep.subr.mxu0 %v385
    %567 = vmatpush1.msra.mxu0 %v384
    %568 = vmatprep.subr.mxu0 %v378
    %569 = vmatpush1.msra.mxu0 %v377
    %570 = vmatprep.subr.mxu0 %v371
    %571 = vmatpush1.msra.mxu0 %v370
    %572 = vmatprep.subr.mxu0 %v364
    %573 = vmatpush1.msra.mxu0 %v363
    %574 = vmatprep.subr.mxu0 %v357
    %575 = vmatpush1.msra.mxu0 %v356
    %576 = vmatprep.subr.mxu0 %v350
    %577 = vmatpush1.msra.mxu0 %v349
    %578 = vmatprep.subr.mxu0 %v343
    %579 = vmatpush1.msra.mxu0 %v342
    %580 = vmatprep.subr.mxu0 %v336
    %581 = vmatpush1.msra.mxu0 %v335
    %582 = vmatprep.subr.mxu0 %v329
    %583 = vmatpush1.msra.mxu0 %v328
    %584 = vmatprep.subr.mxu0 %v322
    %585 = vmatpush1.msra.mxu0 %v321
    %586 = vmatprep.subr.mxu0 %v315
    %587 = vmatpush1.msra.mxu0 %v314
    %588 = vmatprep.subr.mxu0 %v308
    %589 = vmatpush1.msra.mxu0 %v307
    %590 = vmatprep.subr.mxu0 %v301
    %591 = vmatpush1.msra.mxu0 %v300
    %592 = vmatprep.subr.mxu0 %v294
    %593 = vmatpush1.msra.mxu0 %v293
    %594 = vmatprep.subr.mxu0 %v287
    %595 = vmatpush1.msra.mxu0 %v286
    %596 = vmatprep.subr.mxu0 %v280
    %597 = vmatpush1.msra.mxu0 %v279
    %598 = vmatprep.subr.mxu0 0.0
    %599 = vmatpush2.msra.mxu0 0.0
    %600 = vmatprep.subr.mxu0 0.0
    %601 = vmatpush2.msra.mxu0 0.0
    %602 = vmatprep.subr.mxu0 0.0
    %603 = vmatpush2.msra.mxu0 0.0
    %604 = vmatprep.subr.mxu0 0.0
    %605 = vmatpush2.msra.mxu0 0.0
    %606 = vmatprep.subr.mxu0 0.0
    %607 = vmatpush2.msra.mxu0 0.0
    %608 = vmatprep.subr.mxu0 0.0
    %609 = vmatpush2.msra.mxu0 0.0
    %610 = vmatprep.subr.mxu0 0.0
    %611 = vmatpush2.msra.mxu0 0.0
    %612 = vmatprep.subr.mxu0 0.0
    %613 = vmatpush2.msra.mxu0 0.0
    %614 = vmatprep.subr.mxu0 0.0
    %615 = vmatpush2.msra.mxu0 0.0
    %616 = vmatprep.subr.mxu0 0.0
    %617 = vmatpush2.msra.mxu0 0.0
    %618 = vmatprep.subr.mxu0 0.0
    %619 = vmatpush2.msra.mxu0 0.0
    %620 = vmatprep.subr.mxu0 0.0
    %621 = vmatpush2.msra.mxu0 0.0
    %622 = vmatprep.subr.mxu0 0.0
    %623 = vmatpush2.msra.mxu0 0.0
    %624 = vmatprep.subr.mxu0 0.0
    %625 = vmatpush2.msra.mxu0 0.0
    %626 = vmatprep.subr.mxu0 0.0
    %627 = vmatpush2.msra.mxu0 0.0
    %628 = vmatprep.subr.mxu0 0.0
    %629 = vmatpush2.msra.mxu0 0.0
    %630 = vmatprep.mubr.f32.mxu0 0.0
    %631 = vmatmul.mubr.f32.gmra.mxu0 %v274
    %v632 = vpop.f32.mrf.mxu0
    %v633 = vadd.f32 %v408, %v632
    %v634 = vpop.f32.mrf.mxu0
    %v635 = vadd.f32 %v412, %v634
    %636 = vdwg.mxu0
    %637 = vmatprep.subr.mxu0 0.0
    %638 = vmatpush1.msra.mxu0 %v386
    %639 = vmatprep.subr.mxu0 0.0
    %640 = vmatpush1.msra.mxu0 %v379
    %641 = vmatprep.subr.mxu0 0.0
    %642 = vmatpush1.msra.mxu0 %v372
    %643 = vmatprep.subr.mxu0 0.0
    %644 = vmatpush1.msra.mxu0 %v365
    %645 = vmatprep.subr.mxu0 0.0
    %646 = vmatpush1.msra.mxu0 %v358
    %647 = vmatprep.subr.mxu0 0.0
    %648 = vmatpush1.msra.mxu0 %v351
    %649 = vmatprep.subr.mxu0 0.0
    %650 = vmatpush1.msra.mxu0 %v344
    %651 = vmatprep.subr.mxu0 0.0
    %652 = vmatpush1.msra.mxu0 %v337
    %653 = vmatprep.subr.mxu0 0.0
    %654 = vmatpush1.msra.mxu0 %v330
    %655 = vmatprep.subr.mxu0 0.0
    %656 = vmatpush1.msra.mxu0 %v323
    %657 = vmatprep.subr.mxu0 0.0
    %658 = vmatpush1.msra.mxu0 %v316
    %659 = vmatprep.subr.mxu0 0.0
    %660 = vmatpush1.msra.mxu0 %v309
    %661 = vmatprep.subr.mxu0 0.0
    %662 = vmatpush1.msra.mxu0 %v302
    %663 = vmatprep.subr.mxu0 0.0
    %664 = vmatpush1.msra.mxu0 %v295
    %665 = vmatprep.subr.mxu0 0.0
    %666 = vmatpush1.msra.mxu0 %v288
    %667 = vmatprep.subr.mxu0 0.0
    %668 = vmatpush1.msra.mxu0 %v281
    %669 = vmatprep.subr.mxu0 0.0
    %670 = vmatpush2.msra.mxu0 0.0
    %671 = vmatprep.subr.mxu0 0.0
    %672 = vmatpush2.msra.mxu0 0.0
    %673 = vmatprep.subr.mxu0 0.0
    %674 = vmatpush2.msra.mxu0 0.0
    %675 = vmatprep.subr.mxu0 0.0
    %676 = vmatpush2.msra.mxu0 0.0
    %677 = vmatprep.subr.mxu0 0.0
    %678 = vmatpush2.msra.mxu0 0.0
    %679 = vmatprep.subr.mxu0 0.0
    %680 = vmatpush2.msra.mxu0 0.0
    %681 = vmatprep.subr.mxu0 0.0
    %682 = vmatpush2.msra.mxu0 0.0
    %683 = vmatprep.subr.mxu0 0.0
    %684 = vmatpush2.msra.mxu0 0.0
    %685 = vmatprep.subr.mxu0 0.0
    %686 = vmatpush2.msra.mxu0 0.0
    %687 = vmatprep.subr.mxu0 0.0
    %688 = vmatpush2.msra.mxu0 0.0
    %689 = vmatprep.subr.mxu0 0.0
    %690 = vmatpush2.msra.mxu0 0.0
    %691 = vmatprep.subr.mxu0 0.0
    %692 = vmatpush2.msra.mxu0 0.0
    %693 = vmatprep.subr.mxu0 0.0
    %694 = vmatpush2.msra.mxu0 0.0
    %695 = vmatprep.subr.mxu0 0.0
    %696 = vmatpush2.msra.mxu0 0.0
    %697 = vmatprep.subr.mxu0 0.0
    %698 = vmatpush2.msra.mxu0 0.0
    %699 = vmatprep.subr.mxu0 0.0
    %700 = vmatpush2.msra.mxu0 0.0
    %701 = vmatprep.mubr.f32.mxu0 0.0
    %702 = vmatmul.mubr.f32.gmra.mxu0 %v274
    %v703 = vpop.f32.mrf.mxu0
    %v704 = vadd.f32 %v416, %v703
    %v705 = vpop.f32.mrf.mxu0
    %706 = vdwg.mxu0
    %v714 = vcombine.low %v491, %v493
    %v715 = vcombine.high %v491, %v493
    %v716 = vcombine.low %v562, %v564
    %v717 = vcombine.high %v562, %v564
    %v719 = vunpack.c.l.s4 1983009808
    %v720 = vunpack.c.0.s8 %v719
    %v721 = vlaneseq
    %v722 = vshrl.u32 %v721, 7
    %v723 = vsub.s32 %v720, %v722
    %v724 = vrot.slane %v714, %v723
    %v726 = vunpack.c.l.s4 1983009808
    %v727 = vunpack.c.0.s8 %v726
    %v728 = vlaneseq
    %v729 = vshrl.u32 %v728, 7
    %v730 = vsub.s32 %v727, %v729
    %v731 = vrot.slane %v715, %v730
    %v733 = vunpack.c.l.s4 1983009808
    %v734 = vunpack.c.0.s8 %v733
    %v735 = vlaneseq
    %v736 = vshrl.u32 %v735, 7
    %v737 = vsub.s32 %v734, %v736
    %v738 = vrot.slane %v716, %v737
    %v740 = vunpack.c.l.s4 1983009808
    %v741 = vunpack.c.0.s8 %v740
    %v742 = vlaneseq
    %v743 = vshrl.u32 %v742, 7
    %v744 = vsub.s32 %v741, %v743
    %v745 = vrot.slane %v717, %v744
    %v746 = vcombine.low %v724, %v738
    %v747 = vcombine.high %v724, %v738
    %v748 = vcombine.low %v731, %v745
    %v749 = vcombine.high %v731, %v745
    %v750 = vcombine.low %v633, %v635
    %v751 = vcombine.high %v633, %v635
    %v752 = vcombine.high %v704, %v704
    %v754 = vunpack.c.l.s4 1983009808
    %v755 = vunpack.c.0.s8 %v754
    %v756 = vlaneseq
    %v757 = vshrl.u32 %v756, 7
    %v758 = vsub.s32 %v755, %v757
    %v759 = vrot.slane %v750, %v758
    %v761 = vunpack.c.l.s4 1983009808
    %v762 = vunpack.c.0.s8 %v761
    %v763 = vlaneseq
    %v764 = vshrl.u32 %v763, 7
    %v765 = vsub.s32 %v762, %v764
    %v766 = vrot.slane %v751, %v765
    %v768 = vunpack.c.l.s4 1983009808
    %v769 = vunpack.c.0.s8 %v768
    %v770 = vlaneseq
    %v771 = vshrl.u32 %v770, 7
    %v772 = vsub.s32 %v769, %v771
    %v773 = vrot.slane %v704, %v772
    %v775 = vunpack.c.l.s4 1983009808
    %v776 = vunpack.c.0.s8 %v775
    %v777 = vlaneseq
    %v778 = vshrl.u32 %v777, 7
    %v779 = vsub.s32 %v776, %v778
    %v780 = vrot.slane %v752, %v779
    %v781 = vcombine.low %v759, %v773
    %v782 = vcombine.high %v759, %v773
    %v783 = vcombine.low %v766, %v780
    %v784 = vcombine.high %v766, %v780
    %793 = vst [vmem:[#allocation11] sm:$0xff] %v746
    %vm794 = vcmask 1041408
    %vm795 = vcmask 1043458
    %vm796 = vmor %vm795, %vm794
    %vm797 = vcmask 291844
    %vm798 = vmor %vm797, %vm796
    %799 = vst.msk [vmem:[#allocation11 + $0x8] sm:$0x3f] %vm798, %v781
    %800 = vst [vmem:[#allocation11 + $0xe] sm:$0xff] %v747
    %801 = vst.msk [vmem:[#allocation11 + $0x16] sm:$0x3f] %vm798, %v782
    %802 = vst [vmem:[#allocation11 + $0x1c] sm:$0xff] %v748
    %803 = vst.msk [vmem:[#allocation11 + $0x24] sm:$0x3f] %vm798, %v783
    %804 = vst [vmem:[#allocation11 + $0x2a] sm:$0xff] %v749
    %805 = vst.msk [vmem:[#allocation11 + $0x32] sm:$0x3f] %vm798, %v784
    // Predicated region
    $region46: #{tpu_custom_call.1} parent=1 // pred_check
      _
    $region47: #{tpu_custom_call.1} parent=1 // pred_check_branch
      %807 = sbr.rel (0) target = $region49
    $region48: #{tpu_custom_call.1} parent=1 // pred_region
      %s809 = ssub.s32 896, 224
      %810 = vsyncadd [#allocation5], %s809
      %s811 = sshll.u32 [#allocation11], 4
      %s812 = int_to_ptr.vmem [resolvable:$true] %s811
      %817 = dma.vmem_to_hbm [thread:$0]  %s812, 224, %s7, [#allocation5], 224, 224, 14
    $region49: #{tpu_custom_call.1} parent=1 // pred_fallthru
      _
    // Predicated region
    $region50: #{tpu_custom_call.1} parent=1 // pred_check
      _
    $region51: #{tpu_custom_call.1} parent=1 // pred_check_branch
      %819 = sbr.rel (0) target = $region53
    $region52: #{tpu_custom_call.1} parent=1 // pred_region
      %820 = dma.done [#allocation5], 896
    $region53: #{tpu_custom_call.1} parent=1 // pred_fallthru
      _
    %821 = vsyncpa [#allocation4], 1
    %822 = vsyncpa [#allocation7], 1
    %823 = vsyncpa [#allocation10], 1
    %824 = vsyncpa [#allocation5], 1

</llo_original>
